<compile_context>
chip_gen: v5e
topology: v5e:2x2
jax: 0.10.0
libtpu: 0.0.40
codegen_flags: <defaults>
</compile_context>

<pallas_src>
import jax
import jax.numpy as jnp
from jax.experimental import pallas as pl
from jax.experimental.pallas import tpu as pltpu

LANE = 128      # packed lane width (full vregs even for spec_dim < 128)
SUBLANE = 8     # f32 sublane tile
NCORES = 2      # leading "parallel" grid axis: both TCs on v7x, harmless on v5e/v6e


def _round_up(x, m):
    return ((x + m - 1) // m) * m


def _cdiv(a, b):
    return -(-a // b)


def _spectrogram_loss_kernel(gt_ref, corr_ref, inter_ref, out_ref):
    """Reduce one (tile_rows, LANE) chunk of the packed, zero-padded inputs.

    gt_ref/corr_ref/inter_ref : (tile_rows, LANE) VMEM tiles (auto double-buffered)
    out_ref                   : (SUBLANE, LANE) f32 accumulator, resident across the
                                reduction ("arbitrary") axis; one row-block per core.
    """
    @pl.when(pl.program_id(1) == 0)
    def _init():
        out_ref[...] = jnp.zeros_like(out_ref)

    gt = gt_ref[...].astype(jnp.float32)
    corr = corr_ref[...].astype(jnp.float32)
    inter = inter_ref[...].astype(jnp.float32)

    nz = gt != 0.0                                 # pad_mask = (gt != 0)
    dc = jnp.where(nz, corr, 0.0) - gt             # corrected * mask - gt
    di = jnp.where(nz, inter, 0.0) - gt            # intermediate * mask - gt

    # Four loss terms (L1 + MSE on both streams) share one mean denominator ->
    # a single fused per-element contribution suffices.
    contrib = jnp.abs(dc) + dc * dc + jnp.abs(di) + di * di

    # Sublane (XLU) reduce the tile down to one (8, 128) vreg of partial sums.
    out_ref[...] += jnp.sum(contrib.reshape(-1, SUBLANE, LANE), axis=0)


def _pack(x, padded_numel):
    """Flatten to 1D, zero-pad to padded_numel, reshape to (rows, LANE).

    Zero padding is exact for this loss: gt == 0 in the pad region forces the masked
    difference (and hence the contribution) to 0 regardless of the padded activations.
    """
    flat = x.reshape(-1)
    n = flat.shape[0]
    if padded_numel != n:
        flat = jnp.pad(flat, (0, padded_numel - n))
    return flat.reshape(padded_numel // LANE, LANE)


def spectrogram_loss(gt, corrected, intermediate, *, tile_bytes=3 * 1024 * 1024):
    """gt, corrected, intermediate: (B, T, D). Returns the scalar loss (f32)."""
    B, T, D = gt.shape
    numel = B * T * D                              # mean denominator for all four terms

    itemsize = max(jnp.dtype(a.dtype).itemsize for a in (gt, corrected, intermediate))
    sub = 16                                       # multiple of 8 (f32) and 16 (bf16 packing)

    rows_needed = _cdiv(numel, LANE)
    # Size the tile by bytes (~1-4 MiB per input per step) so the ~0.35 us per-step
    # fixed cost stays well below the per-step DMA time on every TPU generation.
    target_rows = max(sub, _round_up(tile_bytes // (LANE * itemsize), sub))
    steps = max(1, _cdiv(rows_needed, NCORES * target_rows))
    num_tiles = NCORES * steps
    tile_rows = _round_up(_cdiv(rows_needed, num_tiles), sub)
    rows_padded = num_tiles * tile_rows
    padded_numel = rows_padded * LANE

    gt_p = _pack(gt, padded_numel)
    corr_p = _pack(corrected, padded_numel)
    inter_p = _pack(intermediate, padded_numel)

    # Core c handles the contiguous tile range [c*steps, (c+1)*steps).
    in_spec = pl.BlockSpec((tile_rows, LANE), lambda c, i: (c * steps + i, 0))
    # Per-core accumulator row-block: mandatory to avoid a write race across "parallel".
    out_spec = pl.BlockSpec((SUBLANE, LANE), lambda c, i: (c, 0))

    cost = pl.CostEstimate(
        flops=12 * padded_numel,
        transcendentals=0,
        bytes_accessed=3 * padded_numel * itemsize + NCORES * SUBLANE * LANE * 4,
    )

    sums = pl.pallas_call(
        _spectrogram_loss_kernel,
        out_shape=jax.ShapeDtypeStruct((NCORES * SUBLANE, LANE), jnp.float32),
        grid=(NCORES, steps),
        in_specs=[in_spec, in_spec, in_spec],
        out_specs=out_spec,
        compiler_params=pltpu.CompilerParams(
            dimension_semantics=("parallel", "arbitrary"),
            vmem_limit_bytes=32 * 1024 * 1024,     # 3 inputs x 2 bufs x ~3 MiB fits; legal on v5e
        ),
        cost_estimate=cost,
    )(gt_p, corr_p, inter_p)

    # All four losses use reduction='mean' over the full (B, T, D) numel; the padded
    # region contributed exactly zero, so a single division is exact.
    return jnp.sum(sums) / numel


def pad_sequence_gt(spectrograms, dtype=jnp.float32):
    """JAX mirror of: pad_sequence([torch.tensor(s).transpose(0,1) for s in specs],
    batch_first=True) -> (B, T_max, spec_dim)."""
    # TODO(synk): ragged-list padding is host/XLA-side data prep (dynamic per-example
    # lengths) with no in-kernel Pallas equivalent; it intentionally stays outside.
    B = len(spectrograms)
    T = max(int(s.shape[1]) for s in spectrograms)
    D = int(spectrograms[0].shape[0])
    gt = jnp.zeros((B, T, D), dtype=dtype)
    for i, s in enumerate(spectrograms):
        gt = gt.at[i, : s.shape[1], :].set(jnp.asarray(s, dtype=dtype).T)
    return gt


def spectrogram_loss_ref(gt, corrected, intermediate):
    """Pure-JAX reference mirroring the PyTorch forward."""
    mask = (gt != 0.0).astype(gt.dtype)
    l1 = lambda a, b: jnp.mean(jnp.abs(a - b))
    l2 = lambda a, b: jnp.mean((a - b) ** 2)
    corr_loss = l1(corrected * mask, gt) + l2(corrected * mask, gt)
    inter_loss = l1(intermediate * mask, gt) + l2(intermediate * mask, gt)
    return corr_loss + inter_loss


if __name__ == "__main__":
    key = jax.random.PRNGKey(0)
    k_spec, k_corr, k_inter = jax.random.split(key, 3)

    # "spectrogram - list of numpy arrays ~ (spec_dim, timesteps)" with ragged lengths.
    spec_dim = 64
    lengths = [100, 120]
    spec_keys = jax.random.split(k_spec, len(lengths))
    spectrogram = [
        jax.random.normal(k, (spec_dim, L), dtype=jnp.float32)
        for k, L in zip(spec_keys, lengths)
    ]

    gt = pad_sequence_gt(spectrogram)                 # (2, 120, 64)
    B, T, D = gt.shape
    corrected = jax.random.normal(k_corr, (B, T, D), dtype=jnp.float32)
    intermediate = jax.random.normal(k_inter, (B, T, D), dtype=jnp.float32)

    ref = spectrogram_loss_ref(gt, corrected, intermediate)

    # Tiny tile so the demo exercises multi-step accumulation + zero-pad tail + 2-core grid.
    loss_small = jax.block_until_ready(
        spectrogram_loss(gt, corrected, intermediate, tile_bytes=16 * 1024)
    )
    # Default (byte-sized) tile path.
    loss_big = jax.block_until_ready(spectrogram_loss(gt, corrected, intermediate))

    for loss in (loss_small, loss_big):
        assert loss.shape == ()
        assert jnp.allclose(loss, ref, atol=1e-5, rtol=1e-4), (
            f"kernel={float(loss)} ref={float(ref)} diff={float(jnp.abs(loss - ref))}"
        )
    print("KERNEL_OK")
</pallas_src>

<mosaic_0001>
module attributes {stable_mosaic.version = 11 : i64} {
  func.func @_spectrogram_loss_kernel(%arg0: i32, %arg1: i32, %arg2: memref<32x128xf32, #tpu.memory_space<vmem>>, %arg3: memref<32x128xf32, #tpu.memory_space<vmem>>, %arg4: memref<32x128xf32, #tpu.memory_space<vmem>>, %arg5: memref<8x128xf32, #tpu.memory_space<vmem>>) attributes {dimension_semantics = [#tpu.dimension_semantics<parallel>, #tpu.dimension_semantics<arbitrary>], iteration_bounds = array<i64: 2, 2>, scalar_prefetch = 0 : i64, scratch_operands = 0 : i64, tpu.core_type = #tpu.core_type<tc>, window_params = [{transform_indices = @transform_0, window_bounds = array<i64: 32, 128>}, {transform_indices = @transform_1, window_bounds = array<i64: 32, 128>}, {transform_indices = @transform_2, window_bounds = array<i64: 32, 128>}, {transform_indices = @transform_3, window_bounds = array<i64: 8, 128>}]} {
    %c0_i32 = arith.constant 0 : i32
    %0 = arith.cmpi eq, %arg1, %c0_i32 : i32
    %1 = arith.extui %0 : i1 to i32
    %c0_i32_0 = arith.constant 0 : i32
    %2 = arith.cmpi ne, %1, %c0_i32_0 : i32
    scf.if %2 {
      %cst_13 = arith.constant 0.000000e+00 : f32
      %26 = vector.broadcast %cst_13 : f32 to vector<8x128xf32>
      %c0_14 = arith.constant 0 : index
      %c0_15 = arith.constant 0 : index
      %27 = vector.load %arg5[%c0_14, %c0_15] : memref<8x128xf32, #tpu.memory_space<vmem>>, vector<8x128xf32>
      tpu.vector_store %arg5[%c0_14, %c0_15], %26 {strides = array<i32>} : memref<8x128xf32, #tpu.memory_space<vmem>>, vector<8x128xf32>,
    } else {
    }
    %c0 = arith.constant 0 : index
    %c0_1 = arith.constant 0 : index
    %3 = vector.load %arg2[%c0, %c0_1] : memref<32x128xf32, #tpu.memory_space<vmem>>, vector<32x128xf32>
    %c0_2 = arith.constant 0 : index
    %c0_3 = arith.constant 0 : index
    %4 = vector.load %arg3[%c0_2, %c0_3] : memref<32x128xf32, #tpu.memory_space<vmem>>, vector<32x128xf32>
    %c0_4 = arith.constant 0 : index
    %c0_5 = arith.constant 0 : index
    %5 = vector.load %arg4[%c0_4, %c0_5] : memref<32x128xf32, #tpu.memory_space<vmem>>, vector<32x128xf32>
    %cst = arith.constant 0.000000e+00 : f32
    %6 = vector.broadcast %cst : f32 to vector<32x128xf32>
    %7 = arith.cmpf one, %3, %6 : vector<32x128xf32>
    %cst_6 = arith.constant 0.000000e+00 : f32
    %8 = vector.broadcast %cst_6 : f32 to vector<32x128xf32>
    %9 = arith.select %7, %4, %8 : vector<32x128xi1>, vector<32x128xf32>
    %10 = arith.subf %9, %3 : vector<32x128xf32>
    %cst_7 = arith.constant 0.000000e+00 : f32
    %11 = vector.broadcast %cst_7 : f32 to vector<32x128xf32>
    %12 = arith.select %7, %5, %11 : vector<32x128xi1>, vector<32x128xf32>
    %13 = arith.subf %12, %3 : vector<32x128xf32>
    %14 = math.absf %10 : vector<32x128xf32>
    %15 = arith.mulf %10, %10 : vector<32x128xf32>
    %16 = arith.addf %14, %15 : vector<32x128xf32>
    %17 = math.absf %13 : vector<32x128xf32>
    %18 = arith.addf %16, %17 : vector<32x128xf32>
    %19 = arith.mulf %13, %13 : vector<32x128xf32>
    %20 = arith.addf %18, %19 : vector<32x128xf32>
    %c0_8 = arith.constant 0 : index
    %c0_9 = arith.constant 0 : index
    %21 = vector.load %arg5[%c0_8, %c0_9] : memref<8x128xf32, #tpu.memory_space<vmem>>, vector<8x128xf32>
    %22 = vector.shape_cast %20 : vector<32x128xf32> to vector<4x8x128xf32>
    %cst_10 = arith.constant dense<0.000000e+00> : vector<8x128xf32>
    %23 = vector.multi_reduction <add>, %22, %cst_10 [0] : vector<4x8x128xf32> to vector<8x128xf32>
    %24 = arith.addf %21, %23 : vector<8x128xf32>
    %c0_11 = arith.constant 0 : index
    %c0_12 = arith.constant 0 : index
    %25 = vector.load %arg5[%c0_11, %c0_12] : memref<8x128xf32, #tpu.memory_space<vmem>>, vector<8x128xf32>
    tpu.vector_store %arg5[%c0_11, %c0_12], %24 {strides = array<i32>} : memref<8x128xf32, #tpu.memory_space<vmem>>, vector<8x128xf32>,
    return
  }
  func.func @transform_0(%arg0: i32, %arg1: i32) -> (i32, i32) {
    %c2_i32 = arith.constant 2 : i32
    %0 = arith.muli %arg0, %c2_i32 : i32
    %1 = arith.addi %0, %arg1 : i32
    %c0_i32 = arith.constant 0 : i32
    %c0_i32_0 = arith.constant 0 : i32
    return %1, %c0_i32 : i32, i32
  }
  func.func @transform_1(%arg0: i32, %arg1: i32) -> (i32, i32) {
    %c2_i32 = arith.constant 2 : i32
    %0 = arith.muli %arg0, %c2_i32 : i32
    %1 = arith.addi %0, %arg1 : i32
    %c0_i32 = arith.constant 0 : i32
    %c0_i32_0 = arith.constant 0 : i32
    return %1, %c0_i32 : i32, i32
  }
  func.func @transform_2(%arg0: i32, %arg1: i32) -> (i32, i32) {
    %c2_i32 = arith.constant 2 : i32
    %0 = arith.muli %arg0, %c2_i32 : i32
    %1 = arith.addi %0, %arg1 : i32
    %c0_i32 = arith.constant 0 : i32
    %c0_i32_0 = arith.constant 0 : i32
    return %1, %c0_i32 : i32, i32
  }
  func.func @transform_3(%arg0: i32, %arg1: i32) -> (i32, i32) {
    %c0_i32 = arith.constant 0 : i32
    %c0_i32_0 = arith.constant 0 : i32
    return %arg0, %c0_i32 : i32, i32
  }
}

</mosaic_0001>

<llo_original>
// kernel: tpu_custom_call.1
$region0: #{tpu_custom_call.1}
  #allocation0 [shape = 'u32[]', space=smem, size = 0x4, offset = 0x4, fixed_abs, tag = 'smem constant byte address 0x4 - core index']
  #allocation1 [shape = 'u32[72,128]{1,0:T(1,128)}', space=vmem, size = 0x9000, scoped, tag = 'internal scratch']
  %s0 = inlined_call_operand.hbm [shape: f32[128,128], index: 0, kind: input, shape index: {}]
  %s1 = inlined_call_operand.hbm [shape: f32[128,128], index: 1, kind: input, shape index: {}]
  %s2 = inlined_call_operand.hbm [shape: f32[128,128], index: 2, kind: input, shape index: {}]
  %s3 = inlined_call_operand.hbm [shape: f32[16,128], index: 3, kind: output, shape index: {}]
  %s4 = sld [smem:[#allocation0]]
  $region61: #{tpu_custom_call.1} parent=0
    _
  %s6 = ssub.s32 1, %s4
  %s7 = scalar_select 0, %s6, %s4
  $region1: #{tpu_custom_call.1} parent=0
    #allocation2 [shape = 'u8[32768]{0}', space=vmem, size = 0x8000, scoped, tag = 'input window, operand 0']
    #allocation3 [shape = 's32[2]{0}', space=sflag, size = 0x8, scoped, tag = 'scoped memory for tpu_custom_call.1']
    #allocation4 [shape = 's32[2]{0}', space=sflag, size = 0x8, scoped, tag = 'scoped memory for tpu_custom_call.1']
    #allocation5 [shape = 'u8[32768]{0}', space=vmem, size = 0x8000, scoped, tag = 'input window, operand 1']
    #allocation6 [shape = 's32[2]{0}', space=sflag, size = 0x8, scoped, tag = 'scoped memory for tpu_custom_call.1']
    #allocation7 [shape = 'u8[32768]{0}', space=vmem, size = 0x8000, scoped, tag = 'input window, operand 2']
    #allocation8 [shape = 'u8[8192]{0}', space=vmem, size = 0x2000, scoped, tag = 'output window, operand 0']
    %8 = vsyncpa [#allocation3], 0
    %s9 = scalar_lea.sflag [#allocation3], 1
    %10 = vsyncpa %s9, 0
    %11 = vsyncpa [#allocation6], 0
    %s12 = scalar_lea.sflag [#allocation6], 1
    %13 = vsyncpa %s12, 0
    %14 = vsyncpa [#allocation4], 0
    %s15 = scalar_lea.sflag [#allocation4], 1
    %16 = vsyncpa %s15, 0
    loop: start=0, step=1, limit=6
    $region2: #{tpu_custom_call.1} parent=1 // loop_pre_header
      _
    $region3: #{tpu_custom_call.1} parent=1 // loop_header
      %s18 = sphi 0, %s22
      %p19 = scmp.ge.s32.totalorder %s18, 6
      %s25 = sphi 0, %s37
      %s26 = sphi 0, %s33
      %s27 = sphi 0, %s25
      %s28 = sphi 0, %s26
      %s29 = sphi 0, %s27
      %s30 = sphi 0, %s28
      %s44 = sphi 0, %s46
      %s47 = sphi 0, %s44
      %s48 = sphi 0, %s47
      %s64 = sphi 0, %s48
      %s74 = sphi 0, %s76
      %s77 = sphi 0, %s74
      %s78 = sphi 0, %s77
      %s94 = sphi 0, %s78
      %s104 = sphi 0, %s106
      %s107 = sphi 0, %s104
      %s108 = sphi 0, %s107
      %s124 = sphi 0, %s108
      %s130 = sphi 0, %s132
      %s133 = sphi 0, %s130
      %s134 = sphi 0, %s133
      %s150 = sphi 0, %s134
    $region4: #{tpu_custom_call.1} parent=1 // loop_header_branch
      %21 = sbr.rel (%p19) target = $region8
    $region5: #{tpu_custom_call.1} parent=1 // loop_body
      %s23 = ssub.s32 %s18, 1
      %s24 = ssub.s32 %s18, 2
      %s31 = sadd.s32 1, %s26
      %p32 = scmp.ge.s32.totalorder %s31, 2
      %s33 = scalar_select %p32, 0, %s31
      %s34 = sadd.s32 1, %s25
      %s35 = scalar_select %p32, %s34, %s25
      %p36 = scmp.ge.s32.totalorder %s35, 2
      %s37 = scalar_select %p36, 0, %s35
      %s38 = smul.u32 %s25, 2
      %s39 = sadd.s32 %s38, %s26
      %s40 = smul.u32 %s37, 2
      %s41 = sadd.s32 %s40, %s33
      %s42 = ssub.s32 %s39, %s41
      %p43 = scmp.eq.s32.totalorder %s42, 0
      %s45 = sadd.s32 %s44, 1
      %s46 = scalar_select %p43, %s44, %s45
      %p49 = pneg %p43
      %p50 = scmp.eq.s32.totalorder %s18, 3
      %p51 = por %p49, %p50
      %p52 = scmp.ne.s32.totalorder %s44, %s47
      %p53 = scmp.eq.s32.totalorder %s18, 0
      %p54 = por %p52, %p53
      %p55 = scmp.ne.s32.totalorder %s44, %s47
      %p56 = scmp.eq.s32.totalorder %s23, 3
      %p57 = por %p55, %p56
      %p58 = scmp.ne.s32.totalorder %s47, %s48
      %p59 = scmp.eq.s32.totalorder %s23, 0
      %p60 = por %p58, %p59
      %p61 = scmp.ne.s32.totalorder %s47, %s48
      %p62 = scmp.eq.s32.totalorder %s24, 3
      %p63 = por %p61, %p62
      %p65 = scmp.ne.s32.totalorder %s48, %s64
      %p66 = scmp.eq.s32.totalorder %s24, 0
      %p67 = por %p65, %p66
      %s68 = smul.u32 %s25, 2
      %s69 = sadd.s32 %s68, %s26
      %s70 = smul.u32 %s37, 2
      %s71 = sadd.s32 %s70, %s33
      %s72 = ssub.s32 %s69, %s71
      %p73 = scmp.eq.s32.totalorder %s72, 0
      %s75 = sadd.s32 %s74, 1
      %s76 = scalar_select %p73, %s74, %s75
      %p79 = pneg %p73
      %p80 = scmp.eq.s32.totalorder %s18, 3
      %p81 = por %p79, %p80
      %p82 = scmp.ne.s32.totalorder %s74, %s77
      %p83 = scmp.eq.s32.totalorder %s18, 0
      %p84 = por %p82, %p83
      %p85 = scmp.ne.s32.totalorder %s74, %s77
      %p86 = scmp.eq.s32.totalorder %s23, 3
      %p87 = por %p85, %p86
      %p88 = scmp.ne.s32.totalorder %s77, %s78
      %p89 = scmp.eq.s32.totalorder %s23, 0
      %p90 = por %p88, %p89
      %p91 = scmp.ne.s32.totalorder %s77, %s78
      %p92 = scmp.eq.s32.totalorder %s24, 3
      %p93 = por %p91, %p92
      %p95 = scmp.ne.s32.totalorder %s78, %s94
      %p96 = scmp.eq.s32.totalorder %s24, 0
      %p97 = por %p95, %p96
      %s98 = smul.u32 %s25, 2
      %s99 = sadd.s32 %s98, %s26
      %s100 = smul.u32 %s37, 2
      %s101 = sadd.s32 %s100, %s33
      %s102 = ssub.s32 %s99, %s101
      %p103 = scmp.eq.s32.totalorder %s102, 0
      %s105 = sadd.s32 %s104, 1
      %s106 = scalar_select %p103, %s104, %s105
      %p109 = pneg %p103
      %p110 = scmp.eq.s32.totalorder %s18, 3
      %p111 = por %p109, %p110
      %p112 = scmp.ne.s32.totalorder %s104, %s107
      %p113 = scmp.eq.s32.totalorder %s18, 0
      %p114 = por %p112, %p113
      %p115 = scmp.ne.s32.totalorder %s104, %s107
      %p116 = scmp.eq.s32.totalorder %s23, 3
      %p117 = por %p115, %p116
      %p118 = scmp.ne.s32.totalorder %s107, %s108
      %p119 = scmp.eq.s32.totalorder %s23, 0
      %p120 = por %p118, %p119
      %p121 = scmp.ne.s32.totalorder %s107, %s108
      %p122 = scmp.eq.s32.totalorder %s24, 3
      %p123 = por %p121, %p122
      %p125 = scmp.ne.s32.totalorder %s108, %s124
      %p126 = scmp.eq.s32.totalorder %s24, 0
      %p127 = por %p125, %p126
      %s128 = ssub.s32 %s25, %s37
      %p129 = scmp.eq.s32.totalorder %s128, 0
      %s131 = sadd.s32 %s130, 1
      %s132 = scalar_select %p129, %s130, %s131
      %p135 = pneg %p129
      %p136 = scmp.eq.s32.totalorder %s18, 3
      %p137 = por %p135, %p136
      %p138 = scmp.ne.s32.totalorder %s130, %s133
      %p139 = scmp.eq.s32.totalorder %s18, 0
      %p140 = por %p138, %p139
      %p141 = scmp.ne.s32.totalorder %s130, %s133
      %p142 = scmp.eq.s32.totalorder %s23, 3
      %p143 = por %p141, %p142
      %p144 = scmp.ne.s32.totalorder %s133, %s134
      %p145 = scmp.eq.s32.totalorder %s23, 0
      %p146 = por %p144, %p145
      %p147 = scmp.ne.s32.totalorder %s133, %s134
      %p148 = scmp.eq.s32.totalorder %s24, 3
      %p149 = por %p147, %p148
      %p151 = scmp.ne.s32.totalorder %s134, %s150
      %p152 = scmp.eq.s32.totalorder %s24, 0
      %p153 = por %p151, %p152
      %p154 = scmp.le.s32.totalorder 1, %s18
      %p155 = scmp.lt.s32.totalorder %s18, 5
      %p156 = pnand %p154, %p155
      %p157 = pneg %p156
      // Predicated region
      $region9: #{tpu_custom_call.1} parent=5 // pred_check
        _
      $region10: #{tpu_custom_call.1} parent=5 // pred_check_branch
        %159 = sbr.rel (%p156) target = $region12
      $region11: #{tpu_custom_call.1} parent=5 // pred_region
        %s160 = ssub.s32 %s18, 1
      $region12: #{tpu_custom_call.1} parent=5 // pred_fallthru
        _
      %p161 = scmp.lt.s32.totalorder %s18, 4
      // Predicated region
      $region13: #{tpu_custom_call.1} parent=5 // pred_check
        %p162 = pneg %p161
      $region14: #{tpu_custom_call.1} parent=5 // pred_check_branch
        %164 = sbr.rel (%p162) target = $region16
      $region15: #{tpu_custom_call.1} parent=5 // pred_region
        // Predicated region
        $region17: #{tpu_custom_call.1} parent=15 // pred_check
          %p165 = pneg %p54
        $region18: #{tpu_custom_call.1} parent=15 // pred_check_branch
          %167 = sbr.rel (%p165) target = $region20
        $region19: #{tpu_custom_call.1} parent=15 // pred_region
          %s168 = sand.u32 %s44, 1
          %s169 = scalar_lea.sflag [#allocation3], %s168
          %s170 = sand.u32 %s44, 1
          %s171 = smul.addr %s170, 32
          %s172 = scalar_lea.vmem [#allocation2], %s171
          %s173 = smul.u32 %s25, 2
          %s174 = sadd.s32 %s173, %s26
          %s175 = smul.u32 4, %s174
          %177 = vsyncadd %s169, 0
          %s178 = smul.addr %s175, 8
          %s179 = scalar_lea.hbm %s0, %s178
          %s180 = sshll.u32 %s179, 4
          %s181 = int_to_ptr.hbm [resolvable:$true] %s180
          %s182 = sshll.u32 %s172, 4
          %s183 = int_to_ptr.vmem [resolvable:$true] %s182
          %188 = dma.hbm_to_vmem [thread:$0]  %s181, 512, %s183, %s169, 128, 128, 8
        $region20: #{tpu_custom_call.1} parent=15 // pred_fallthru
          _
        // Predicated region
        $region21: #{tpu_custom_call.1} parent=15 // pred_check
          %p189 = pneg %p84
        $region22: #{tpu_custom_call.1} parent=15 // pred_check_branch
          %191 = sbr.rel (%p189) target = $region24
        $region23: #{tpu_custom_call.1} parent=15 // pred_region
          %s192 = sand.u32 %s18, 1
          %s193 = scalar_lea.sflag [#allocation6], %s192
          %s194 = sand.u32 %s74, 1
          %s195 = smul.addr %s194, 32
          %s196 = scalar_lea.vmem [#allocation5], %s195
          %s197 = smul.u32 %s25, 2
          %s198 = sadd.s32 %s197, %s26
          %s199 = smul.u32 4, %s198
          %201 = vsyncadd %s193, 0
          %s202 = smul.addr %s199, 8
          %s203 = scalar_lea.hbm %s1, %s202
          %s204 = sshll.u32 %s203, 4
          %s205 = int_to_ptr.hbm [resolvable:$true] %s204
          %s206 = sshll.u32 %s196, 4
          %s207 = int_to_ptr.vmem [resolvable:$true] %s206
          %212 = dma.hbm_to_vmem [thread:$0]  %s205, 512, %s207, %s193, 128, 128, 8
        $region24: #{tpu_custom_call.1} parent=15 // pred_fallthru
          _
        // Predicated region
        $region25: #{tpu_custom_call.1} parent=15 // pred_check
          %p213 = pneg %p114
        $region26: #{tpu_custom_call.1} parent=15 // pred_check_branch
          %215 = sbr.rel (%p213) target = $region28
        $region27: #{tpu_custom_call.1} parent=15 // pred_region
          %s216 = sand.u32 %s18, 1
          %s217 = scalar_lea.sflag [#allocation6], %s216
          %s218 = sand.u32 %s104, 1
          %s219 = smul.addr %s218, 32
          %s220 = scalar_lea.vmem [#allocation7], %s219
          %s221 = smul.u32 %s25, 2
          %s222 = sadd.s32 %s221, %s26
          %s223 = smul.u32 4, %s222
          %225 = vsyncadd %s217, 0
          %s226 = smul.addr %s223, 8
          %s227 = scalar_lea.hbm %s2, %s226
          %s228 = sshll.u32 %s227, 4
          %s229 = int_to_ptr.hbm [resolvable:$true] %s228
          %s230 = sshll.u32 %s220, 4
          %s231 = int_to_ptr.vmem [resolvable:$true] %s230
          %236 = dma.hbm_to_vmem [thread:$0]  %s229, 512, %s231, %s217, 128, 128, 8
        $region28: #{tpu_custom_call.1} parent=15 // pred_fallthru
          _
      $region16: #{tpu_custom_call.1} parent=5 // pred_fallthru
        _
      %p237 = scmp.le.s32.totalorder 1, %s18
      %p238 = scmp.lt.s32.totalorder %s18, 5
      %p239 = pnand %p237, %p238
      %p240 = pneg %p239
      // Predicated region
      $region29: #{tpu_custom_call.1} parent=5 // pred_check
        _
      $region30: #{tpu_custom_call.1} parent=5 // pred_check_branch
        %242 = sbr.rel (%p239) target = $region32
      $region31: #{tpu_custom_call.1} parent=5 // pred_region
        %s243 = ssub.s32 %s18, 1
        %s244 = sand.u32 %s47, 1
        %s245 = scalar_lea.sflag [#allocation3], %s244
        %s246 = sand.u32 %s47, 1
        %s247 = smul.addr %s246, 32
        %s248 = scalar_lea.vmem [#allocation2], %s247
        // Predicated region
        $region33: #{tpu_custom_call.1} parent=31 // pred_check
          %p249 = pneg %p60
        $region34: #{tpu_custom_call.1} parent=31 // pred_check_branch
          %251 = sbr.rel (%p249) target = $region36
        $region35: #{tpu_custom_call.1} parent=31 // pred_region
          %253 = dma.done %s245, 512
        $region36: #{tpu_custom_call.1} parent=31 // pred_fallthru
          _
        %s254 = sand.u32 %s23, 1
        %s255 = scalar_lea.sflag [#allocation6], %s254
        %s256 = sand.u32 %s77, 1
        %s257 = smul.addr %s256, 32
        %s258 = scalar_lea.vmem [#allocation5], %s257
        // Predicated region
        $region37: #{tpu_custom_call.1} parent=31 // pred_check
          %p259 = pneg %p90
        $region38: #{tpu_custom_call.1} parent=31 // pred_check_branch
          %261 = sbr.rel (%p259) target = $region40
        $region39: #{tpu_custom_call.1} parent=31 // pred_region
          %263 = dma.done %s255, 512
        $region40: #{tpu_custom_call.1} parent=31 // pred_fallthru
          _
        %s264 = sand.u32 %s23, 1
        %s265 = scalar_lea.sflag [#allocation6], %s264
        %s266 = sand.u32 %s107, 1
        %s267 = smul.addr %s266, 32
        %s268 = scalar_lea.vmem [#allocation7], %s267
        // Predicated region
        $region41: #{tpu_custom_call.1} parent=31 // pred_check
          %p269 = pneg %p120
        $region42: #{tpu_custom_call.1} parent=31 // pred_check_branch
          %271 = sbr.rel (%p269) target = $region44
        $region43: #{tpu_custom_call.1} parent=31 // pred_region
          %273 = dma.done %s265, 512
        $region44: #{tpu_custom_call.1} parent=31 // pred_fallthru
          _
        %s274 = sand.u32 %s47, 1
        %s275 = scalar_lea.sflag [#allocation3], %s274
        %s276 = sand.u32 %s47, 1
        %s277 = smul.addr %s276, 32
        %s278 = scalar_lea.vmem [#allocation2], %s277
        %p279 = pneg %p60
        %p280 = pneg %p57
        %s281 = sand.u32 %s23, 1
        %s282 = scalar_lea.sflag [#allocation6], %s281
        %s283 = sand.u32 %s77, 1
        %s284 = smul.addr %s283, 32
        %s285 = scalar_lea.vmem [#allocation5], %s284
        %p286 = pneg %p90
        %p287 = pneg %p87
        %s288 = sand.u32 %s23, 1
        %s289 = scalar_lea.sflag [#allocation6], %s288
        %s290 = sand.u32 %s107, 1
        %s291 = smul.addr %s290, 32
        %s292 = scalar_lea.vmem [#allocation7], %s291
        %p293 = pneg %p120
        %p294 = pneg %p117
        %p295 = pneg %p146
        %p296 = pneg %p143
        %s297 = sand.u32 %s133, 1
        %s298 = scalar_lea.sflag [#allocation4], %s297
        %s299 = sand.u32 %s133, 1
        %s300 = smul.addr %s299, 8
        %s301 = scalar_lea.vmem [#allocation8], %s300
        %s302 = smul.u32 %s27, 2
        %s303 = sadd.s32 %s302, %s28
        %s304 = smul.u32 4, %s303
        %s305 = smul.u32 %s27, 2
        %s306 = sadd.s32 %s305, %s28
        %s307 = smul.u32 4, %s306
        %s308 = smul.u32 %s27, 2
        %s309 = sadd.s32 %s308, %s28
        %s310 = smul.u32 4, %s309
        %p311 = scmp.eq.s32.totalorder %s28, 0
        // Predicated region
        $region45: #{tpu_custom_call.1} parent=31 // pred_check
          %p312 = pneg %p311
        $region46: #{tpu_custom_call.1} parent=31 // pred_check_branch
          %314 = sbr.rel (%p312) target = $region48
        $region47: #{tpu_custom_call.1} parent=31 // pred_region
          %315 = vst [vmem:[%s301] sm:$0xff] 0.0
        $region48: #{tpu_custom_call.1} parent=31 // pred_fallthru
          _
        %v316 = vld [vmem:[%s248] sm:$0xff]
        %v317 = vld [vmem:[%s248 + $0x8] sm:$0xff]
        %v318 = vld [vmem:[%s248 + $0x10] sm:$0xff]
        %v319 = vld [vmem:[%s248 + $0x18] sm:$0xff]
        %v320 = vld [vmem:[%s258] sm:$0xff]
        %v321 = vld [vmem:[%s258 + $0x8] sm:$0xff]
        %v322 = vld [vmem:[%s258 + $0x10] sm:$0xff]
        %v323 = vld [vmem:[%s258 + $0x18] sm:$0xff]
        %v324 = vld [vmem:[%s268] sm:$0xff]
        %v325 = vld [vmem:[%s268 + $0x8] sm:$0xff]
        %v326 = vld [vmem:[%s268 + $0x10] sm:$0xff]
        %v327 = vld [vmem:[%s268 + $0x18] sm:$0xff]
        %vm328 = vcmp.ne.f32.partialorder %v316, 0.0
        %vm329 = vcmp.ne.f32.partialorder %v317, 0.0
        %vm330 = vcmp.ne.f32.partialorder %v318, 0.0
        %vm331 = vcmp.ne.f32.partialorder %v319, 0.0
        %v332 = vsel %vm328, %v320, 0.0
        %v333 = vsel %vm329, %v321, 0.0
        %v334 = vsel %vm330, %v322, 0.0
        %v335 = vsel %vm331, %v323, 0.0
        %v336 = vsub.f32 %v332, %v316
        %v337 = vsub.f32 %v333, %v317
        %v338 = vsub.f32 %v334, %v318
        %v339 = vsub.f32 %v335, %v319
        %v340 = vsel %vm328, %v324, 0.0
        %v341 = vsel %vm329, %v325, 0.0
        %v342 = vsel %vm330, %v326, 0.0
        %v343 = vsel %vm331, %v327, 0.0
        %v344 = vsub.f32 %v340, %v316
        %v345 = vsub.f32 %v341, %v317
        %v346 = vsub.f32 %v342, %v318
        %v347 = vsub.f32 %v343, %v319
        %v348 = vand.u32 2147483647, %v336
        %v349 = vand.u32 2147483647, %v337
        %v350 = vand.u32 2147483647, %v338
        %v351 = vand.u32 2147483647, %v339
        %v352 = vmul.f32 %v336, %v336
        %v353 = vmul.f32 %v337, %v337
        %v354 = vmul.f32 %v338, %v338
        %v355 = vmul.f32 %v339, %v339
        %v356 = vadd.f32 %v348, %v352
        %v357 = vadd.f32 %v349, %v353
        %v358 = vadd.f32 %v350, %v354
        %v359 = vadd.f32 %v351, %v355
        %v360 = vand.u32 2147483647, %v344
        %v361 = vand.u32 2147483647, %v345
        %v362 = vand.u32 2147483647, %v346
        %v363 = vand.u32 2147483647, %v347
        %v364 = vadd.f32 %v356, %v360
        %v365 = vadd.f32 %v357, %v361
        %v366 = vadd.f32 %v358, %v362
        %v367 = vadd.f32 %v359, %v363
        %v368 = vmul.f32 %v344, %v344
        %v369 = vmul.f32 %v345, %v345
        %v370 = vmul.f32 %v346, %v346
        %v371 = vmul.f32 %v347, %v347
        %v372 = vadd.f32 %v364, %v368
        %v373 = vadd.f32 %v365, %v369
        %v374 = vadd.f32 %v366, %v370
        %v375 = vadd.f32 %v367, %v371
        %v376 = vld [vmem:[%s301] sm:$0xff]
        %v377 = vadd.f32 %v372, %v373
        %v378 = vadd.f32 %v377, %v374
        %v379 = vadd.f32 %v378, %v375
        %v380 = vadd.f32 %v376, %v379
        %381 = vst [vmem:[%s301] sm:$0xff] %v380
        %s382 = sand.u32 %s133, 1
        %s383 = scalar_lea.sflag [#allocation4], %s382
        %s384 = sand.u32 %s133, 1
        %s385 = smul.addr %s384, 8
        %s386 = scalar_lea.vmem [#allocation8], %s385
        // Predicated region
        $region49: #{tpu_custom_call.1} parent=31 // pred_check
          %p387 = pneg %p143
        $region50: #{tpu_custom_call.1} parent=31 // pred_check_branch
          %389 = sbr.rel (%p387) target = $region52
        $region51: #{tpu_custom_call.1} parent=31 // pred_region
          %391 = vsyncadd %s383, 0
          %s392 = smul.addr %s27, 8
          %s393 = scalar_lea.hbm %s3, %s392
          %s395 = sshll.u32 %s386, 4
          %s396 = int_to_ptr.vmem [resolvable:$true] %s395
          %s397 = sshll.u32 %s393, 4
          %s398 = int_to_ptr.hbm [resolvable:$true] %s397
          %400 = dma.vmem_to_hbm [thread:$0]  %s396, 128, %s398, %s383
        $region52: #{tpu_custom_call.1} parent=31 // pred_fallthru
          _
      $region32: #{tpu_custom_call.1} parent=5 // pred_fallthru
        _
      %p401 = scmp.le.s32.totalorder 2, %s18
      // Predicated region
      $region53: #{tpu_custom_call.1} parent=5 // pred_check
        %p402 = pneg %p401
      $region54: #{tpu_custom_call.1} parent=5 // pred_check_branch
        %404 = sbr.rel (%p402) target = $region56
      $region55: #{tpu_custom_call.1} parent=5 // pred_region
        %s405 = ssub.s32 %s18, 2
        // Predicated region
        $region57: #{tpu_custom_call.1} parent=55 // pred_check
          %p406 = pneg %p149
        $region58: #{tpu_custom_call.1} parent=55 // pred_check_branch
          %408 = sbr.rel (%p406) target = $region60
        $region59: #{tpu_custom_call.1} parent=55 // pred_region
          %s409 = sand.u32 %s134, 1
          %s410 = scalar_lea.sflag [#allocation4], %s409
          %s411 = sand.u32 %s134, 1
          %s412 = smul.addr %s411, 8
          %s413 = scalar_lea.vmem [#allocation8], %s412
          %415 = dma.done %s410, 128
        $region60: #{tpu_custom_call.1} parent=55 // pred_fallthru
          _
      $region56: #{tpu_custom_call.1} parent=5 // pred_fallthru
        _
    $region6: #{tpu_custom_call.1} parent=1 // loop_footer
      %s22 = sadd.s32 1, %s18
    $region7: #{tpu_custom_call.1} parent=1 // loop_footer_branch
      %17 = sbr.rel target = $region3
    $region8: #{tpu_custom_call.1} parent=1 // loop_exit
      _
    %416 = vsyncpa [#allocation3], 1
    %s417 = scalar_lea.sflag [#allocation3], 1
    %418 = vsyncpa %s417, 1
    %419 = vsyncpa [#allocation6], 1
    %s420 = scalar_lea.sflag [#allocation6], 1
    %421 = vsyncpa %s420, 1
    %422 = vsyncpa [#allocation4], 1
    %s423 = scalar_lea.sflag [#allocation4], 1
    %424 = vsyncpa %s423, 1

</llo_original>
